<compile_context>
chip_gen: v6e
topology: v6e:2x2x1
jax: 0.10.0
libtpu: 0.0.40
codegen_flags: <defaults>
</compile_context>

<pallas_src>
import math
from functools import partial

import jax
import jax.numpy as jnp
from jax import lax
from jax.experimental import pallas as pl
from jax.experimental.pallas import tpu as pltpu

_MASK_VALUE = -1e30  # finite sentinel (NOT -inf) -> online softmax stays NaN-free


def _vmem_estimate(tile, H, Hk, D, itemsize):
    """Rough per-step VMEM footprint (bytes) for tile selection."""
    q_blk = H * tile * D * itemsize
    kv_blk = 2 * Hk * tile * D * itemsize
    out_blk = tile * H * D * itemsize
    blocks = 2 * (q_blk + kv_blk + out_blk)               # double-buffered pipeline
    scratch = H * tile * (2 * 4 + D * 4 + D * itemsize)   # m, l, acc (f32), scaled q
    temps = 2 * H * tile * tile * 4                       # f32 score/prob transients
    return blocks + scratch + temps


def _pick_tile(S, H, Hk, D, itemsize, budget=24 * 2**20):
    """Largest power-of-two tile dividing S that fits a conservative VMEM budget
    (keeps the kernel inside scoped VMEM on v5e/v7x even for larger H)."""
    candidates = [t for t in (512, 256, 128) if S % t == 0]
    if not candidates:
        return S  # tiny / irregular S: single full-length tile (block == full dim)
    for t in candidates:
        if _vmem_estimate(t, H, Hk, D, itemsize) <= budget:
            return t
    return candidates[-1]


def _use_bf16_exp(dtype):
    """bf16 EUP exists on v6e/v7x (not v2-v5); only worth it for bf16 inputs."""
    if jnp.dtype(dtype) != jnp.dtype(jnp.bfloat16):
        return False
    try:
        kind = jax.devices()[0].device_kind.lower()
    except Exception:
        return False
    return not any(f"v{n}" in kind for n in (2, 3, 4, 5))


def _flash_attn_kernel(qi_ref, ki_ref, q_ref, k_ref, v_ref, o_ref,
                       m_sc, l_sc, acc_sc, qs_sc,
                       *, scale, tile, heads, kv_heads, exp_bf16):
    t = pl.program_id(1)
    qi = qi_ref[t]          # q-tile index for this (triangular) step
    ki = ki_ref[t]          # kv-tile index for this step (always ki <= qi)
    G = heads // kv_heads   # query heads per KV head (GQA group size)
    D = q_ref.shape[-1]

    # ---- per-q-tile init: reset online-softmax state, pre-scale Q once -----
    @pl.when(ki == 0)
    def _init():
        m_sc[...] = jnp.full(m_sc.shape, _MASK_VALUE, m_sc.dtype)
        l_sc[...] = jnp.zeros(l_sc.shape, l_sc.dtype)
        acc_sc[...] = jnp.zeros(acc_sc.shape, acc_sc.dtype)
        q = q_ref[0]                                   # (H, tile, D)
        if G > 1:                                      # fold head groups into rows
            q = q.reshape(kv_heads, G * tile, D)
        qs_sc[...] = q * scale                         # scale in input dtype, once

    def _attend(on_diag):
        k = k_ref[0]                                   # (Hk, tile, D)
        v = v_ref[0]                                   # (Hk, tile, D)
        # Batched QK^T contracting head_dim directly (no transposed K tile).
        s = lax.dot_general(qs_sc[...], k, (((2,), (2,)), ((0,), (0,))),
                            preferred_element_type=jnp.float32)  # (Hk, G*tile, tile)

        if on_diag:
            # Single 2-D iota mask (identical across heads / groups).
            rows = lax.broadcasted_iota(jnp.int32, (tile, tile), 0)
            cols = lax.broadcasted_iota(jnp.int32, (tile, tile), 1)
            mask = rows >= cols
            if G == 1:
                s = jnp.where(mask, s, _MASK_VALUE)
            else:
                s = jnp.where(mask, s.reshape(kv_heads, G, tile, tile),
                              _MASK_VALUE).reshape(kv_heads, G * tile, tile)

        # Online softmax update.
        m_prev = m_sc[...]                                     # (Hk, G*tile, 1)
        m_new = jnp.maximum(m_prev, jnp.max(s, axis=-1, keepdims=True))
        alpha = jnp.exp(m_prev - m_new)
        if exp_bf16:
            p = jnp.exp((s - m_new).astype(jnp.bfloat16))       # bf16 EUP (v6e/v7x)
            p_sum = jnp.sum(p.astype(jnp.float32), axis=-1, keepdims=True)
        else:
            p = jnp.exp(s - m_new)
            p_sum = jnp.sum(p, axis=-1, keepdims=True)
        l_sc[...] = alpha * l_sc[...] + p_sum
        pv = lax.dot_general(p.astype(v.dtype), v, (((2,), (1,)), ((0,), (0,))),
                             preferred_element_type=jnp.float32)  # (Hk, G*tile, D)
        acc_sc[...] = alpha * acc_sc[...] + pv
        m_sc[...] = m_new

    # Off-diagonal tiles: fully unmasked -> no iota / compare / select at all.
    @pl.when(ki < qi)
    def _off_diag():
        _attend(on_diag=False)

    # Diagonal tile: masked update, then finalize and write the output block.
    @pl.when(ki == qi)
    def _diag_and_finalize():
        _attend(on_diag=True)
        inv_l = pl.reciprocal(l_sc[...], approx=True)          # EUP, not a divide
        ctx = acc_sc[...] * inv_l                              # (Hk, G*tile, D) f32
        chunks = []
        for kv in range(kv_heads):
            for g in range(G):
                chunks.append(ctx[kv, g * tile:(g + 1) * tile, :])
        out = chunks[0] if len(chunks) == 1 else jnp.concatenate(chunks, axis=-1)
        o_ref[0] = out.astype(o_ref.dtype)                     # (tile, H*D) lane-dense


def unfused_dot_product_attention(q_sbhd, k_sbhd, v_sbhd, norm_factor, tile=None):
    """q/k/v: [S, B, H(q|kv), D] (TE sbhd layout). Returns [S, B, H*D]."""
    S, B, H, D = q_sbhd.shape
    Sk, Bk, Hk, Dk = k_sbhd.shape
    assert k_sbhd.shape == v_sbhd.shape, "Keys and values must have the same shape!"
    assert (Sk, Bk, Dk) == (S, B, D)
    assert H % Hk == 0, "q heads must be divisible by KV (GQA) heads"
    G = H // Hk

    scale = 1.0 / float(norm_factor)

    # sbhd -> bhsd.  TODO(synk): index the sbhd HBM arrays directly from the
    # BlockSpecs (block (tile,1,H,D)) to remove these three transpose passes.
    qb = jnp.transpose(q_sbhd, (1, 2, 0, 3))        # (B, H,  S, D)
    kb = jnp.transpose(k_sbhd, (1, 2, 0, 3))        # (B, Hk, S, D)  (no jnp.repeat)
    vb = jnp.transpose(v_sbhd, (1, 2, 0, 3))

    itemsize = q_sbhd.dtype.itemsize
    if tile is None:
        tile = _pick_tile(S, H, Hk, D, itemsize)
    assert S % tile == 0
    n_tiles = S // tile

    # Lower-triangular (causal) schedule: only tiles with ki <= qi are visited.
    qi_list, ki_list = [], []
    for q_i in range(n_tiles):
        for k_i in range(q_i + 1):
            qi_list.append(q_i)
            ki_list.append(k_i)
    qi_arr = jnp.asarray(qi_list, dtype=jnp.int32)
    ki_arr = jnp.asarray(ki_list, dtype=jnp.int32)
    n_steps = len(qi_list)

    HD = H * D
    exp_bf16 = _use_bf16_exp(q_sbhd.dtype)

    kernel = partial(_flash_attn_kernel, scale=scale, tile=tile,
                     heads=H, kv_heads=Hk, exp_bf16=exp_bf16)

    grid_spec = pltpu.PrefetchScalarGridSpec(
        num_scalar_prefetch=2,                       # qi[], ki[] live in SMEM
        grid=(B, n_steps),
        in_specs=[
            pl.BlockSpec((1, H, tile, D), lambda b, t, qi, ki: (b, 0, qi[t], 0)),
            pl.BlockSpec((1, Hk, tile, D), lambda b, t, qi, ki: (b, 0, ki[t], 0)),
            pl.BlockSpec((1, Hk, tile, D), lambda b, t, qi, ki: (b, 0, ki[t], 0)),
        ],
        out_specs=pl.BlockSpec((1, tile, HD), lambda b, t, qi, ki: (b, qi[t], 0)),
        scratch_shapes=[
            pltpu.VMEM((Hk, G * tile, 1), jnp.float32),   # running max m
            pltpu.VMEM((Hk, G * tile, 1), jnp.float32),   # running sum l
            pltpu.VMEM((Hk, G * tile, D), jnp.float32),   # output accumulator
            pltpu.VMEM((Hk, G * tile, D), q_sbhd.dtype),  # pre-scaled Q tile
        ],
    )

    est = _vmem_estimate(tile, H, Hk, D, itemsize)
    vmem_limit = int(min(48 * 2**20, max(32 * 2**20, 2 * est)))

    out_bsd = pl.pallas_call(
        kernel,
        out_shape=jax.ShapeDtypeStruct((B, S, HD), q_sbhd.dtype),
        grid_spec=grid_spec,
        compiler_params=pltpu.CompilerParams(
            dimension_semantics=("parallel", "arbitrary"),
            vmem_limit_bytes=vmem_limit,
        ),
    )(qi_arr, ki_arr, qb, kb, vb)

    # (B, S, H*D) -> (S, B, H*D), matching context_layer.view(seqlen, batch, -1).
    # TODO(synk): emit (S, B, H*D) directly (block (tile,1,H*D)) or return
    # (B, S, H*D) if the consumer allows it, removing this last HBM pass.
    return jnp.transpose(out_bsd, (1, 0, 2))


def _reference(q_sbhd, k_sbhd, v_sbhd, norm_factor):
    S, B, H, D = q_sbhd.shape
    Hk = k_sbhd.shape[2]
    if Hk != H:  # repeat_interleave, like the torch module
        k_sbhd = jnp.repeat(k_sbhd, H // Hk, axis=2)
        v_sbhd = jnp.repeat(v_sbhd, H // Hk, axis=2)
    scale = 1.0 / float(norm_factor)
    q = jnp.transpose(q_sbhd, (1, 2, 0, 3)).astype(jnp.float32)
    k = jnp.transpose(k_sbhd, (1, 2, 0, 3)).astype(jnp.float32)
    v = jnp.transpose(v_sbhd, (1, 2, 0, 3)).astype(jnp.float32)
    s = jnp.einsum("bhqd,bhkd->bhqk", q, k) * scale
    mask = jnp.tril(jnp.ones((S, S), dtype=bool))
    s = jnp.where(mask, s, -jnp.inf)
    p = jax.nn.softmax(s, axis=-1)
    o = jnp.einsum("bhqk,bhkd->bhqd", p, v)
    return jnp.transpose(o, (2, 0, 1, 3)).reshape(S, B, H * D)


def _run_case(S, B, H, D, seed, Hk=None, tile=None):
    Hk = H if Hk is None else Hk
    norm_factor = math.sqrt(D)
    key = jax.random.PRNGKey(seed)
    kq, kk, kv = jax.random.split(key, 3)
    q = jax.random.normal(kq, (S, B, H, D), dtype=jnp.bfloat16)
    k = jax.random.normal(kk, (S, B, Hk, D), dtype=jnp.bfloat16)
    v = jax.random.normal(kv, (S, B, Hk, D), dtype=jnp.bfloat16)

    out = jax.block_until_ready(
        unfused_dot_product_attention(q, k, v, norm_factor, tile=tile))
    ref = _reference(q, k, v, norm_factor)
    assert out.shape == (S, B, H * D)
    err = float(jnp.max(jnp.abs(out.astype(jnp.float32) - ref)))
    assert err < 5e-2, f"max abs err {err} at S={S},B={B},H={H},Hk={Hk},D={D}"


if __name__ == "__main__":
    # Module-consistent small shape: seq=8, batch=2, heads=2, head_dim=32.
    _run_case(S=8, B=2, H=2, D=32, seed=0)
    # Multi-tile triangular schedule (3 steps instead of a 2x2 square grid).
    _run_case(S=256, B=1, H=2, D=32, seed=1, tile=128)
    # GQA: 4 query heads sharing 2 KV heads, no K/V repeat in HBM.
    _run_case(S=256, B=1, H=4, D=32, seed=2, Hk=2, tile=128)
    print("KERNEL_OK")
</pallas_src>

<mosaic_0001>
module attributes {stable_mosaic.version = 11 : i64} {
  func.func @_flash_attn_kernel(%arg0: i32, %arg1: i32, %arg2: memref<1xi32, #tpu.memory_space<smem>>, %arg3: memref<1xi32, #tpu.memory_space<smem>>, %arg4: memref<1x2x8x32xbf16, #tpu.memory_space<vmem>>, %arg5: memref<1x2x8x32xbf16, #tpu.memory_space<vmem>>, %arg6: memref<1x2x8x32xbf16, #tpu.memory_space<vmem>>, %arg7: memref<1x8x64xbf16, #tpu.memory_space<vmem>>, %arg8: memref<2x8x1xf32, #tpu.memory_space<vmem>>, %arg9: memref<2x8x1xf32, #tpu.memory_space<vmem>>, %arg10: memref<2x8x32xf32, #tpu.memory_space<vmem>>, %arg11: memref<2x8x32xbf16, #tpu.memory_space<vmem>>) attributes {dimension_semantics = [#tpu.dimension_semantics<parallel>, #tpu.dimension_semantics<arbitrary>], iteration_bounds = array<i64: 2, 1>, scalar_prefetch = 2 : i64, scratch_operands = 4 : i64, tpu.core_type = #tpu.core_type<tc>, window_params = [{transform_indices = @transform_0, window_bounds = array<i64: 1, 2, 8, 32>}, {transform_indices = @transform_1, window_bounds = array<i64: 1, 2, 8, 32>}, {transform_indices = @transform_2, window_bounds = array<i64: 1, 2, 8, 32>}, {transform_indices = @transform_3, window_bounds = array<i64: 1, 8, 64>}]} {
    %0 = arith.index_cast %arg1 : i32 to index
    %1 = memref.load %arg2[%0] : memref<1xi32, #tpu.memory_space<smem>>
    %2 = arith.index_cast %arg1 : i32 to index
    %3 = memref.load %arg3[%2] : memref<1xi32, #tpu.memory_space<smem>>
    %c0_i32 = arith.constant 0 : i32
    %4 = arith.cmpi eq, %3, %c0_i32 : i32
    %5 = arith.extui %4 : i1 to i32
    %c0_i32_0 = arith.constant 0 : i32
    %6 = arith.cmpi ne, %5, %c0_i32_0 : i32
    scf.if %6 {
      %cst = arith.constant -1.000000e+30 : f32
      %13 = vector.broadcast %cst : f32 to vector<2x8x1xf32>
      %c0 = arith.constant 0 : index
      %c0_3 = arith.constant 0 : index
      %c0_4 = arith.constant 0 : index
      %14 = vector.load %arg8[%c0, %c0_3, %c0_4] : memref<2x8x1xf32, #tpu.memory_space<vmem>>, vector<2x8x1xf32>
      tpu.vector_store %arg8[%c0, %c0_3, %c0_4], %13 {strides = array<i32>} : memref<2x8x1xf32, #tpu.memory_space<vmem>>, vector<2x8x1xf32>,
      %cst_5 = arith.constant 0.000000e+00 : f32
      %15 = vector.broadcast %cst_5 : f32 to vector<2x8x1xf32>
      %c0_6 = arith.constant 0 : index
      %c0_7 = arith.constant 0 : index
      %c0_8 = arith.constant 0 : index
      %16 = vector.load %arg9[%c0_6, %c0_7, %c0_8] : memref<2x8x1xf32, #tpu.memory_space<vmem>>, vector<2x8x1xf32>
      tpu.vector_store %arg9[%c0_6, %c0_7, %c0_8], %15 {strides = array<i32>} : memref<2x8x1xf32, #tpu.memory_space<vmem>>, vector<2x8x1xf32>,
      %cst_9 = arith.constant 0.000000e+00 : f32
      %17 = vector.broadcast %cst_9 : f32 to vector<2x8x32xf32>
      %c0_10 = arith.constant 0 : index
      %c0_11 = arith.constant 0 : index
      %c0_12 = arith.constant 0 : index
      %18 = vector.load %arg10[%c0_10, %c0_11, %c0_12] : memref<2x8x32xf32, #tpu.memory_space<vmem>>, vector<2x8x32xf32>
      tpu.vector_store %arg10[%c0_10, %c0_11, %c0_12], %17 {strides = array<i32>} : memref<2x8x32xf32, #tpu.memory_space<vmem>>, vector<2x8x32xf32>,
      %c0_13 = arith.constant 0 : index
      %c0_14 = arith.constant 0 : index
      %c0_15 = arith.constant 0 : index
      %c0_16 = arith.constant 0 : index
      %19 = vector.load %arg4[%c0_13, %c0_14, %c0_15, %c0_16] : memref<1x2x8x32xbf16, #tpu.memory_space<vmem>>, vector<1x2x8x32xbf16>
      %20 = vector.shape_cast %19 : vector<1x2x8x32xbf16> to vector<2x8x32xbf16>
      %cst_17 = arith.constant 1.767580e-01 : bf16
      %21 = vector.broadcast %cst_17 : bf16 to vector<2x8x32xbf16>
      %22 = arith.mulf %20, %21 : vector<2x8x32xbf16>
      %c0_18 = arith.constant 0 : index
      %c0_19 = arith.constant 0 : index
      %c0_20 = arith.constant 0 : index
      %23 = vector.load %arg11[%c0_18, %c0_19, %c0_20] : memref<2x8x32xbf16, #tpu.memory_space<vmem>>, vector<2x8x32xbf16>
      tpu.vector_store %arg11[%c0_18, %c0_19, %c0_20], %22 {strides = array<i32>} : memref<2x8x32xbf16, #tpu.memory_space<vmem>>, vector<2x8x32xbf16>,
    } else {
    }
    %7 = arith.cmpi slt, %3, %1 : i32
    %8 = arith.extui %7 : i1 to i32
    %c0_i32_1 = arith.constant 0 : i32
    %9 = arith.cmpi ne, %8, %c0_i32_1 : i32
    scf.if %9 {
      %c0 = arith.constant 0 : index
      %c0_3 = arith.constant 0 : index
      %c0_4 = arith.constant 0 : index
      %c0_5 = arith.constant 0 : index
      %13 = vector.load %arg5[%c0, %c0_3, %c0_4, %c0_5] : memref<1x2x8x32xbf16, #tpu.memory_space<vmem>>, vector<1x2x8x32xbf16>
      %14 = vector.shape_cast %13 : vector<1x2x8x32xbf16> to vector<2x8x32xbf16>
      %c0_6 = arith.constant 0 : index
      %c0_7 = arith.constant 0 : index
      %c0_8 = arith.constant 0 : index
      %c0_9 = arith.constant 0 : index
      %15 = vector.load %arg6[%c0_6, %c0_7, %c0_8, %c0_9] : memref<1x2x8x32xbf16, #tpu.memory_space<vmem>>, vector<1x2x8x32xbf16>
      %16 = vector.shape_cast %15 : vector<1x2x8x32xbf16> to vector<2x8x32xbf16>
      %c0_10 = arith.constant 0 : index
      %c0_11 = arith.constant 0 : index
      %c0_12 = arith.constant 0 : index
      %17 = vector.load %arg11[%c0_10, %c0_11, %c0_12] : memref<2x8x32xbf16, #tpu.memory_space<vmem>>, vector<2x8x32xbf16>
      %cst = arith.constant dense<0.000000e+00> : vector<2x8x8xf32>
      %18 = tpu.matmul %17, %14, %cst {dimension_numbers = #tpu.dot_dimension_numbers<[2], [2], [1], [1], [0, 0, 0, 1, 1, 1], [0], [0]>} : vector<2x8x32xbf16>, vector<2x8x32xbf16>, vector<2x8x8xf32> -> vector<2x8x8xf32>
      %c0_13 = arith.constant 0 : index
      %c0_14 = arith.constant 0 : index
      %c0_15 = arith.constant 0 : index
      %19 = vector.load %arg8[%c0_13, %c0_14, %c0_15] : memref<2x8x1xf32, #tpu.memory_space<vmem>>, vector<2x8x1xf32>
      %cst_16 = arith.constant dense<0xFF800000> : vector<2x8xf32>
      %20 = vector.multi_reduction <maximumf>, %18, %cst_16 [2] : vector<2x8x8xf32> to vector<2x8xf32>
      %21 = vector.shape_cast %20 : vector<2x8xf32> to vector<2x8x1xf32>
      %22 = arith.maximumf %19, %21 : vector<2x8x1xf32>
      %23 = arith.subf %19, %22 : vector<2x8x1xf32>
      %24 = math.exp %23 : vector<2x8x1xf32>
      %25 = vector.broadcast %22 : vector<2x8x1xf32> to vector<2x8x8xf32>
      %26 = arith.subf %18, %25 : vector<2x8x8xf32>
      %27 = arith.truncf %26 : vector<2x8x8xf32> to vector<2x8x8xbf16>
      %28 = math.exp %27 : vector<2x8x8xbf16>
      %29 = arith.extf %28 : vector<2x8x8xbf16> to vector<2x8x8xf32>
      %cst_17 = arith.constant dense<0.000000e+00> : vector<2x8xf32>
      %30 = vector.multi_reduction <add>, %29, %cst_17 [2] : vector<2x8x8xf32> to vector<2x8xf32>
      %31 = vector.shape_cast %30 : vector<2x8xf32> to vector<2x8x1xf32>
      %c0_18 = arith.constant 0 : index
      %c0_19 = arith.constant 0 : index
      %c0_20 = arith.constant 0 : index
      %32 = vector.load %arg9[%c0_18, %c0_19, %c0_20] : memref<2x8x1xf32, #tpu.memory_space<vmem>>, vector<2x8x1xf32>
      %33 = arith.mulf %24, %32 : vector<2x8x1xf32>
      %34 = arith.addf %33, %31 : vector<2x8x1xf32>
      %c0_21 = arith.constant 0 : index
      %c0_22 = arith.constant 0 : index
      %c0_23 = arith.constant 0 : index
      %35 = vector.load %arg9[%c0_21, %c0_22, %c0_23] : memref<2x8x1xf32, #tpu.memory_space<vmem>>, vector<2x8x1xf32>
      tpu.vector_store %arg9[%c0_21, %c0_22, %c0_23], %34 {strides = array<i32>} : memref<2x8x1xf32, #tpu.memory_space<vmem>>, vector<2x8x1xf32>,
      %cst_24 = arith.constant dense<0.000000e+00> : vector<2x8x32xf32>
      %36 = tpu.matmul %28, %16, %cst_24 {dimension_numbers = #tpu.dot_dimension_numbers<[2], [1], [1], [2], [0, 0, 0, 1, 1, 2], [0], [0]>} : vector<2x8x8xbf16>, vector<2x8x32xbf16>, vector<2x8x32xf32> -> vector<2x8x32xf32>
      %c0_25 = arith.constant 0 : index
      %c0_26 = arith.constant 0 : index
      %c0_27 = arith.constant 0 : index
      %37 = vector.load %arg10[%c0_25, %c0_26, %c0_27] : memref<2x8x32xf32, #tpu.memory_space<vmem>>, vector<2x8x32xf32>
      %38 = vector.broadcast %24 : vector<2x8x1xf32> to vector<2x8x32xf32>
      %39 = arith.mulf %38, %37 : vector<2x8x32xf32>
      %40 = arith.addf %39, %36 : vector<2x8x32xf32>
      %c0_28 = arith.constant 0 : index
      %c0_29 = arith.constant 0 : index
      %c0_30 = arith.constant 0 : index
      %41 = vector.load %arg10[%c0_28, %c0_29, %c0_30] : memref<2x8x32xf32, #tpu.memory_space<vmem>>, vector<2x8x32xf32>
      tpu.vector_store %arg10[%c0_28, %c0_29, %c0_30], %40 {strides = array<i32>} : memref<2x8x32xf32, #tpu.memory_space<vmem>>, vector<2x8x32xf32>,
      %c0_31 = arith.constant 0 : index
      %c0_32 = arith.constant 0 : index
      %c0_33 = arith.constant 0 : index
      %42 = vector.load %arg8[%c0_31, %c0_32, %c0_33] : memref<2x8x1xf32, #tpu.memory_space<vmem>>, vector<2x8x1xf32>
      tpu.vector_store %arg8[%c0_31, %c0_32, %c0_33], %22 {strides = array<i32>} : memref<2x8x1xf32, #tpu.memory_space<vmem>>, vector<2x8x1xf32>,
    } else {
    }
    %10 = arith.cmpi eq, %3, %1 : i32
    %11 = arith.extui %10 : i1 to i32
    %c0_i32_2 = arith.constant 0 : i32
    %12 = arith.cmpi ne, %11, %c0_i32_2 : i32
    scf.if %12 {
      %c0 = arith.constant 0 : index
      %c0_3 = arith.constant 0 : index
      %c0_4 = arith.constant 0 : index
      %c0_5 = arith.constant 0 : index
      %13 = vector.load %arg5[%c0, %c0_3, %c0_4, %c0_5] : memref<1x2x8x32xbf16, #tpu.memory_space<vmem>>, vector<1x2x8x32xbf16>
      %14 = vector.shape_cast %13 : vector<1x2x8x32xbf16> to vector<2x8x32xbf16>
      %c0_6 = arith.constant 0 : index
      %c0_7 = arith.constant 0 : index
      %c0_8 = arith.constant 0 : index
      %c0_9 = arith.constant 0 : index
      %15 = vector.load %arg6[%c0_6, %c0_7, %c0_8, %c0_9] : memref<1x2x8x32xbf16, #tpu.memory_space<vmem>>, vector<1x2x8x32xbf16>
      %16 = vector.shape_cast %15 : vector<1x2x8x32xbf16> to vector<2x8x32xbf16>
      %c0_10 = arith.constant 0 : index
      %c0_11 = arith.constant 0 : index
      %c0_12 = arith.constant 0 : index
      %17 = vector.load %arg11[%c0_10, %c0_11, %c0_12] : memref<2x8x32xbf16, #tpu.memory_space<vmem>>, vector<2x8x32xbf16>
      %cst = arith.constant dense<0.000000e+00> : vector<2x8x8xf32>
      %18 = tpu.matmul %17, %14, %cst {dimension_numbers = #tpu.dot_dimension_numbers<[2], [2], [1], [1], [0, 0, 0, 1, 1, 1], [0], [0]>} : vector<2x8x32xbf16>, vector<2x8x32xbf16>, vector<2x8x8xf32> -> vector<2x8x8xf32>
      %19 = tpu.iota {dimensions = array<i32: 0>} : vector<8x8xi32>
      %20 = tpu.iota {dimensions = array<i32: 1>} : vector<8x8xi32>
      %21 = arith.cmpi sge, %19, %20 : vector<8x8xi32>
      %cst_13 = arith.constant -1.000000e+30 : f32
      %22 = vector.shape_cast %21 : vector<8x8xi1> to vector<1x8x8xi1>
      %23 = vector.broadcast %22 : vector<1x8x8xi1> to vector<2x8x8xi1>
      %24 = vector.broadcast %cst_13 : f32 to vector<2x8x8xf32>
      %25 = arith.select %23, %18, %24 : vector<2x8x8xi1>, vector<2x8x8xf32>
      %c0_14 = arith.constant 0 : index
      %c0_15 = arith.constant 0 : index
      %c0_16 = arith.constant 0 : index
      %26 = vector.load %arg8[%c0_14, %c0_15, %c0_16] : memref<2x8x1xf32, #tpu.memory_space<vmem>>, vector<2x8x1xf32>
      %cst_17 = arith.constant dense<0xFF800000> : vector<2x8xf32>
      %27 = vector.multi_reduction <maximumf>, %25, %cst_17 [2] : vector<2x8x8xf32> to vector<2x8xf32>
      %28 = vector.shape_cast %27 : vector<2x8xf32> to vector<2x8x1xf32>
      %29 = arith.maximumf %26, %28 : vector<2x8x1xf32>
      %30 = arith.subf %26, %29 : vector<2x8x1xf32>
      %31 = math.exp %30 : vector<2x8x1xf32>
      %32 = vector.broadcast %29 : vector<2x8x1xf32> to vector<2x8x8xf32>
      %33 = arith.subf %25, %32 : vector<2x8x8xf32>
      %34 = arith.truncf %33 : vector<2x8x8xf32> to vector<2x8x8xbf16>
      %35 = math.exp %34 : vector<2x8x8xbf16>
      %36 = arith.extf %35 : vector<2x8x8xbf16> to vector<2x8x8xf32>
      %cst_18 = arith.constant dense<0.000000e+00> : vector<2x8xf32>
      %37 = vector.multi_reduction <add>, %36, %cst_18 [2] : vector<2x8x8xf32> to vector<2x8xf32>
      %38 = vector.shape_cast %37 : vector<2x8xf32> to vector<2x8x1xf32>
      %c0_19 = arith.constant 0 : index
      %c0_20 = arith.constant 0 : index
      %c0_21 = arith.constant 0 : index
      %39 = vector.load %arg9[%c0_19, %c0_20, %c0_21] : memref<2x8x1xf32, #tpu.memory_space<vmem>>, vector<2x8x1xf32>
      %40 = arith.mulf %31, %39 : vector<2x8x1xf32>
      %41 = arith.addf %40, %38 : vector<2x8x1xf32>
      %c0_22 = arith.constant 0 : index
      %c0_23 = arith.constant 0 : index
      %c0_24 = arith.constant 0 : index
      %42 = vector.load %arg9[%c0_22, %c0_23, %c0_24] : memref<2x8x1xf32, #tpu.memory_space<vmem>>, vector<2x8x1xf32>
      tpu.vector_store %arg9[%c0_22, %c0_23, %c0_24], %41 {strides = array<i32>} : memref<2x8x1xf32, #tpu.memory_space<vmem>>, vector<2x8x1xf32>,
      %cst_25 = arith.constant dense<0.000000e+00> : vector<2x8x32xf32>
      %43 = tpu.matmul %35, %16, %cst_25 {dimension_numbers = #tpu.dot_dimension_numbers<[2], [1], [1], [2], [0, 0, 0, 1, 1, 2], [0], [0]>} : vector<2x8x8xbf16>, vector<2x8x32xbf16>, vector<2x8x32xf32> -> vector<2x8x32xf32>
      %c0_26 = arith.constant 0 : index
      %c0_27 = arith.constant 0 : index
      %c0_28 = arith.constant 0 : index
      %44 = vector.load %arg10[%c0_26, %c0_27, %c0_28] : memref<2x8x32xf32, #tpu.memory_space<vmem>>, vector<2x8x32xf32>
      %45 = vector.broadcast %31 : vector<2x8x1xf32> to vector<2x8x32xf32>
      %46 = arith.mulf %45, %44 : vector<2x8x32xf32>
      %47 = arith.addf %46, %43 : vector<2x8x32xf32>
      %c0_29 = arith.constant 0 : index
      %c0_30 = arith.constant 0 : index
      %c0_31 = arith.constant 0 : index
      %48 = vector.load %arg10[%c0_29, %c0_30, %c0_31] : memref<2x8x32xf32, #tpu.memory_space<vmem>>, vector<2x8x32xf32>
      tpu.vector_store %arg10[%c0_29, %c0_30, %c0_31], %47 {strides = array<i32>} : memref<2x8x32xf32, #tpu.memory_space<vmem>>, vector<2x8x32xf32>,
      %c0_32 = arith.constant 0 : index
      %c0_33 = arith.constant 0 : index
      %c0_34 = arith.constant 0 : index
      %49 = vector.load %arg8[%c0_32, %c0_33, %c0_34] : memref<2x8x1xf32, #tpu.memory_space<vmem>>, vector<2x8x1xf32>
      tpu.vector_store %arg8[%c0_32, %c0_33, %c0_34], %29 {strides = array<i32>} : memref<2x8x1xf32, #tpu.memory_space<vmem>>, vector<2x8x1xf32>,
      %c0_35 = arith.constant 0 : index
      %c0_36 = arith.constant 0 : index
      %c0_37 = arith.constant 0 : index
      %50 = vector.load %arg9[%c0_35, %c0_36, %c0_37] : memref<2x8x1xf32, #tpu.memory_space<vmem>>, vector<2x8x1xf32>
      %51 = tpu.reciprocal %50 {approx = true} : vector<2x8x1xf32> -> vector<2x8x1xf32>
      %c0_38 = arith.constant 0 : index
      %c0_39 = arith.constant 0 : index
      %c0_40 = arith.constant 0 : index
      %52 = vector.load %arg10[%c0_38, %c0_39, %c0_40] : memref<2x8x32xf32, #tpu.memory_space<vmem>>, vector<2x8x32xf32>
      %53 = vector.broadcast %51 : vector<2x8x1xf32> to vector<2x8x32xf32>
      %54 = arith.mulf %52, %53 : vector<2x8x32xf32>
      %55 = vector.extract_strided_slice %54 {offsets = [0, 0, 0], sizes = [1, 8, 32], strides = [1, 1, 1]} : vector<2x8x32xf32> to vector<1x8x32xf32>
      %56 = vector.shape_cast %55 : vector<1x8x32xf32> to vector<8x32xf32>
      %57 = vector.extract_strided_slice %54 {offsets = [1, 0, 0], sizes = [1, 8, 32], strides = [1, 1, 1]} : vector<2x8x32xf32> to vector<1x8x32xf32>
      %58 = vector.shape_cast %57 : vector<1x8x32xf32> to vector<8x32xf32>
      %59 = tpu.concatenate %56, %58 in 1 : vector<8x32xf32>, vector<8x32xf32> -> vector<8x64xf32>
      %60 = arith.truncf %59 : vector<8x64xf32> to vector<8x64xbf16>
      %c0_41 = arith.constant 0 : index
      %c0_42 = arith.constant 0 : index
      %c0_43 = arith.constant 0 : index
      %61 = vector.load %arg7[%c0_41, %c0_42, %c0_43] : memref<1x8x64xbf16, #tpu.memory_space<vmem>>, vector<1x8x64xbf16>
      %62 = vector.shape_cast %61 : vector<1x8x64xbf16> to vector<8x64xbf16>
      %63 = vector.shape_cast %60 : vector<8x64xbf16> to vector<1x8x64xbf16>
      tpu.vector_store %arg7[%c0_41, %c0_42, %c0_43], %63 {strides = array<i32>} : memref<1x8x64xbf16, #tpu.memory_space<vmem>>, vector<1x8x64xbf16>,
    } else {
    }
    return
  }
  func.func @transform_0(%arg0: i32, %arg1: i32, %arg2: memref<1xi32, #tpu.memory_space<smem>>, %arg3: memref<1xi32, #tpu.memory_space<smem>>) -> (i32, i32, i32, i32) {
    %0 = arith.index_cast %arg1 : i32 to index
    %1 = memref.load %arg2[%0] : memref<1xi32, #tpu.memory_space<smem>>
    %c0_i32 = arith.constant 0 : i32
    %c0_i32_0 = arith.constant 0 : i32
    %c0_i32_1 = arith.constant 0 : i32
    return %arg0, %c0_i32, %1, %c0_i32_0 : i32, i32, i32, i32
  }
  func.func @transform_1(%arg0: i32, %arg1: i32, %arg2: memref<1xi32, #tpu.memory_space<smem>>, %arg3: memref<1xi32, #tpu.memory_space<smem>>) -> (i32, i32, i32, i32) {
    %0 = arith.index_cast %arg1 : i32 to index
    %1 = memref.load %arg3[%0] : memref<1xi32, #tpu.memory_space<smem>>
    %c0_i32 = arith.constant 0 : i32
    %c0_i32_0 = arith.constant 0 : i32
    %c0_i32_1 = arith.constant 0 : i32
    return %arg0, %c0_i32, %1, %c0_i32_0 : i32, i32, i32, i32
  }
  func.func @transform_2(%arg0: i32, %arg1: i32, %arg2: memref<1xi32, #tpu.memory_space<smem>>, %arg3: memref<1xi32, #tpu.memory_space<smem>>) -> (i32, i32, i32, i32) {
    %0 = arith.index_cast %arg1 : i32 to index
    %1 = memref.load %arg3[%0] : memref<1xi32, #tpu.memory_space<smem>>
    %c0_i32 = arith.constant 0 : i32
    %c0_i32_0 = arith.constant 0 : i32
    %c0_i32_1 = arith.constant 0 : i32
    return %arg0, %c0_i32, %1, %c0_i32_0 : i32, i32, i32, i32
  }
  func.func @transform_3(%arg0: i32, %arg1: i32, %arg2: memref<1xi32, #tpu.memory_space<smem>>, %arg3: memref<1xi32, #tpu.memory_space<smem>>) -> (i32, i32, i32) {
    %0 = arith.index_cast %arg1 : i32 to index
    %1 = memref.load %arg2[%0] : memref<1xi32, #tpu.memory_space<smem>>
    %c0_i32 = arith.constant 0 : i32
    %c0_i32_0 = arith.constant 0 : i32
    return %arg0, %1, %c0_i32 : i32, i32, i32
  }
}

</mosaic_0001>

<llo_original>
// kernel: tpu_custom_call.1
$region0: #{tpu_custom_call.1}
  #allocation0 [shape = 'u32[]', space=smem, size = 0x4, offset = 0x4, fixed_abs, tag = 'smem constant byte address 0x4 - core index']
  #allocation1 [shape = 'u32[144,128]{1,0:T(1,128)}', space=vmem, size = 0x12000, scoped, tag = 'internal scratch']
  #allocation2 [shape = 'f32[2,8,1]{2,1,0:T(8,128)}', space=vmem, size = 0x2000, scoped, tag = 'scratch operand']
  #allocation3 [shape = 'f32[2,8,1]{2,1,0:T(8,128)}', space=vmem, size = 0x2000, scoped, tag = 'scratch operand']
  #allocation4 [shape = 'f32[2,8,32]{2,1,0:T(8,128)}', space=vmem, size = 0x2000, scoped, tag = 'scratch operand']
  #allocation5 [shape = 'bf16[2,8,32]{2,1,0:T(8,128)(2,1)}', space=vmem, size = 0x1000, scoped, tag = 'scratch operand']
  #allocation6 [shape = 's32[1]{0}', space=sflag, size = 0x4, scoped, tag = 'scoped memory for tpu_custom_call.1']
  #allocation7 [shape = 's32[1]{0:T(128)S(6)}', space=smem, size = 0x200, scoped, tag = 'prefetched SMEM operand 0']
  #allocation8 [shape = 's32[1]{0:T(128)S(6)}', space=smem, size = 0x200, scoped, tag = 'prefetched SMEM operand 1']
  %s0 = inlined_call_operand.<no memory space> [shape: s32[1], index: 0, kind: input, shape index: {}]
  %s1 = inlined_call_operand.<no memory space> [shape: s32[1], index: 1, kind: input, shape index: {}]
  %s2 = inlined_call_operand.hbm [shape: bf16[2,2,8,32], index: 2, kind: input, shape index: {}]
  %s3 = inlined_call_operand.hbm [shape: bf16[2,2,8,32], index: 3, kind: input, shape index: {}]
  %s4 = inlined_call_operand.hbm [shape: bf16[2,2,8,32], index: 4, kind: input, shape index: {}]
  %s5 = inlined_call_operand.hbm [shape: bf16[2,8,64], index: 5, kind: output, shape index: {}]
  %s6 = sld [smem:[#allocation0]]
  $region69: #{tpu_custom_call.1} parent=0
    _
  %s8 = ssub.s32 1, %s6
  %s9 = scalar_select 0, %s8, %s6
  %10 = sst [smem:[#allocation7]] %s0
  %11 = sst [smem:[#allocation8]] %s1
  $region1: #{tpu_custom_call.1} parent=0
    #allocation9 [shape = 'u8[8192]{0}', space=vmem, size = 0x2000, scoped, tag = 'input window, operand 2']
    #allocation10 [shape = 's32[2]{0}', space=sflag, size = 0x8, scoped, tag = 'scoped memory for tpu_custom_call.1']
    #allocation11 [shape = 's32[2]{0}', space=sflag, size = 0x8, scoped, tag = 'scoped memory for tpu_custom_call.1']
    #allocation12 [shape = 'u8[8192]{0}', space=vmem, size = 0x2000, scoped, tag = 'input window, operand 3']
    #allocation13 [shape = 's32[2]{0}', space=sflag, size = 0x8, scoped, tag = 'scoped memory for tpu_custom_call.1']
    #allocation14 [shape = 'u8[8192]{0}', space=vmem, size = 0x2000, scoped, tag = 'input window, operand 4']
    #allocation15 [shape = 'u8[4096]{0}', space=vmem, size = 0x1000, scoped, tag = 'output window, operand 0']
    %12 = vsyncpa [#allocation10], 0
    %s13 = scalar_lea.sflag [#allocation10], 1
    %14 = vsyncpa %s13, 0
    %15 = vsyncpa [#allocation13], 0
    %s16 = scalar_lea.sflag [#allocation13], 1
    %17 = vsyncpa %s16, 0
    %18 = vsyncpa [#allocation11], 0
    %s19 = scalar_lea.sflag [#allocation11], 1
    %20 = vsyncpa %s19, 0
    loop: start=0, step=1, limit=4
    $region2: #{tpu_custom_call.1} parent=1 // loop_pre_header
      _
    $region3: #{tpu_custom_call.1} parent=1 // loop_header
      %s22 = sphi 0, %s26
      %p23 = scmp.ge.s32.totalorder %s22, 4
      %s29 = sphi 0, %s41
      %s30 = sphi 0, %s37
      %s31 = sphi 0, %s29
      %s32 = sphi 0, %s30
      %s33 = sphi 0, %s31
      %s34 = sphi 0, %s32
      %s48 = sphi 0, %s50
      %s51 = sphi 0, %s48
      %s52 = sphi 0, %s51
      %s68 = sphi 0, %s52
      %s78 = sphi 0, %s80
      %s81 = sphi 0, %s78
      %s82 = sphi 0, %s81
      %s98 = sphi 0, %s82
      %s108 = sphi 0, %s110
      %s111 = sphi 0, %s108
      %s112 = sphi 0, %s111
      %s128 = sphi 0, %s112
      %s138 = sphi 0, %s140
      %s141 = sphi 0, %s138
      %s142 = sphi 0, %s141
      %s158 = sphi 0, %s142
    $region4: #{tpu_custom_call.1} parent=1 // loop_header_branch
      %25 = sbr.rel (%p23) target = $region8
    $region5: #{tpu_custom_call.1} parent=1 // loop_body
      %s27 = ssub.s32 %s22, 1
      %s28 = ssub.s32 %s22, 2
      %s35 = sadd.s32 1, %s30
      %p36 = scmp.ge.s32.totalorder %s35, 1
      %s37 = scalar_select %p36, 0, %s35
      %s38 = sadd.s32 1, %s29
      %s39 = scalar_select %p36, %s38, %s29
      %p40 = scmp.ge.s32.totalorder %s39, 2
      %s41 = scalar_select %p40, 0, %s39
      %s42 = sld [smem:[#allocation7 + %s30]]
      %s43 = sld [smem:[#allocation7 + %s37]]
      %s44 = ssub.s32 %s29, %s41
      %s45 = ssub.s32 %s42, %s43
      %s46 = sor.u32 %s44, %s45
      %p47 = scmp.eq.s32.totalorder %s46, 0
      %s49 = sadd.s32 %s48, 1
      %s50 = scalar_select %p47, %s48, %s49
      %p53 = pneg %p47
      %p54 = scmp.eq.s32.totalorder %s22, 1
      %p55 = por %p53, %p54
      %p56 = scmp.ne.s32.totalorder %s48, %s51
      %p57 = scmp.eq.s32.totalorder %s22, 0
      %p58 = por %p56, %p57
      %p59 = scmp.ne.s32.totalorder %s48, %s51
      %p60 = scmp.eq.s32.totalorder %s27, 1
      %p61 = por %p59, %p60
      %p62 = scmp.ne.s32.totalorder %s51, %s52
      %p63 = scmp.eq.s32.totalorder %s27, 0
      %p64 = por %p62, %p63
      %p65 = scmp.ne.s32.totalorder %s51, %s52
      %p66 = scmp.eq.s32.totalorder %s28, 1
      %p67 = por %p65, %p66
      %p69 = scmp.ne.s32.totalorder %s52, %s68
      %p70 = scmp.eq.s32.totalorder %s28, 0
      %p71 = por %p69, %p70
      %s72 = sld [smem:[#allocation8 + %s30]]
      %s73 = sld [smem:[#allocation8 + %s37]]
      %s74 = ssub.s32 %s29, %s41
      %s75 = ssub.s32 %s72, %s73
      %s76 = sor.u32 %s74, %s75
      %p77 = scmp.eq.s32.totalorder %s76, 0
      %s79 = sadd.s32 %s78, 1
      %s80 = scalar_select %p77, %s78, %s79
      %p83 = pneg %p77
      %p84 = scmp.eq.s32.totalorder %s22, 1
      %p85 = por %p83, %p84
      %p86 = scmp.ne.s32.totalorder %s78, %s81
      %p87 = scmp.eq.s32.totalorder %s22, 0
      %p88 = por %p86, %p87
      %p89 = scmp.ne.s32.totalorder %s78, %s81
      %p90 = scmp.eq.s32.totalorder %s27, 1
      %p91 = por %p89, %p90
      %p92 = scmp.ne.s32.totalorder %s81, %s82
      %p93 = scmp.eq.s32.totalorder %s27, 0
      %p94 = por %p92, %p93
      %p95 = scmp.ne.s32.totalorder %s81, %s82
      %p96 = scmp.eq.s32.totalorder %s28, 1
      %p97 = por %p95, %p96
      %p99 = scmp.ne.s32.totalorder %s82, %s98
      %p100 = scmp.eq.s32.totalorder %s28, 0
      %p101 = por %p99, %p100
      %s102 = sld [smem:[#allocation8 + %s30]]
      %s103 = sld [smem:[#allocation8 + %s37]]
      %s104 = ssub.s32 %s29, %s41
      %s105 = ssub.s32 %s102, %s103
      %s106 = sor.u32 %s104, %s105
      %p107 = scmp.eq.s32.totalorder %s106, 0
      %s109 = sadd.s32 %s108, 1
      %s110 = scalar_select %p107, %s108, %s109
      %p113 = pneg %p107
      %p114 = scmp.eq.s32.totalorder %s22, 1
      %p115 = por %p113, %p114
      %p116 = scmp.ne.s32.totalorder %s108, %s111
      %p117 = scmp.eq.s32.totalorder %s22, 0
      %p118 = por %p116, %p117
      %p119 = scmp.ne.s32.totalorder %s108, %s111
      %p120 = scmp.eq.s32.totalorder %s27, 1
      %p121 = por %p119, %p120
      %p122 = scmp.ne.s32.totalorder %s111, %s112
      %p123 = scmp.eq.s32.totalorder %s27, 0
      %p124 = por %p122, %p123
      %p125 = scmp.ne.s32.totalorder %s111, %s112
      %p126 = scmp.eq.s32.totalorder %s28, 1
      %p127 = por %p125, %p126
      %p129 = scmp.ne.s32.totalorder %s112, %s128
      %p130 = scmp.eq.s32.totalorder %s28, 0
      %p131 = por %p129, %p130
      %s132 = sld [smem:[#allocation7 + %s30]]
      %s133 = sld [smem:[#allocation7 + %s37]]
      %s134 = ssub.s32 %s29, %s41
      %s135 = ssub.s32 %s132, %s133
      %s136 = sor.u32 %s134, %s135
      %p137 = scmp.eq.s32.totalorder %s136, 0
      %s139 = sadd.s32 %s138, 1
      %s140 = scalar_select %p137, %s138, %s139
      %p143 = pneg %p137
      %p144 = scmp.eq.s32.totalorder %s22, 1
      %p145 = por %p143, %p144
      %p146 = scmp.ne.s32.totalorder %s138, %s141
      %p147 = scmp.eq.s32.totalorder %s22, 0
      %p148 = por %p146, %p147
      %p149 = scmp.ne.s32.totalorder %s138, %s141
      %p150 = scmp.eq.s32.totalorder %s27, 1
      %p151 = por %p149, %p150
      %p152 = scmp.ne.s32.totalorder %s141, %s142
      %p153 = scmp.eq.s32.totalorder %s27, 0
      %p154 = por %p152, %p153
      %p155 = scmp.ne.s32.totalorder %s141, %s142
      %p156 = scmp.eq.s32.totalorder %s28, 1
      %p157 = por %p155, %p156
      %p159 = scmp.ne.s32.totalorder %s142, %s158
      %p160 = scmp.eq.s32.totalorder %s28, 0
      %p161 = por %p159, %p160
      %p162 = scmp.le.s32.totalorder 1, %s22
      %p163 = scmp.lt.s32.totalorder %s22, 3
      %p164 = pnand %p162, %p163
      %p165 = pneg %p164
      // Predicated region
      $region9: #{tpu_custom_call.1} parent=5 // pred_check
        _
      $region10: #{tpu_custom_call.1} parent=5 // pred_check_branch
        %167 = sbr.rel (%p164) target = $region12
      $region11: #{tpu_custom_call.1} parent=5 // pred_region
        %s168 = ssub.s32 %s22, 1
      $region12: #{tpu_custom_call.1} parent=5 // pred_fallthru
        _
      %p169 = scmp.lt.s32.totalorder %s22, 2
      // Predicated region
      $region13: #{tpu_custom_call.1} parent=5 // pred_check
        %p170 = pneg %p169
      $region14: #{tpu_custom_call.1} parent=5 // pred_check_branch
        %172 = sbr.rel (%p170) target = $region16
      $region15: #{tpu_custom_call.1} parent=5 // pred_region
        // Predicated region
        $region17: #{tpu_custom_call.1} parent=15 // pred_check
          %p173 = pneg %p58
        $region18: #{tpu_custom_call.1} parent=15 // pred_check_branch
          %175 = sbr.rel (%p173) target = $region20
        $region19: #{tpu_custom_call.1} parent=15 // pred_region
          %s176 = sand.u32 %s48, 1
          %s177 = scalar_lea.sflag [#allocation10], %s176
          %s178 = sand.u32 %s48, 1
          %s179 = smul.addr %s178, 8
          %s180 = scalar_lea.vmem [#allocation9], %s179
          %s181 = sld [smem:[#allocation7 + %s30]]
          %s183 = ssub.s32 128, 128
          %184 = vsyncadd %s177, %s183
          %s185 = smul.addr %s29, 2
          %s186 = sadd.s32 %s181, %s185
          %s187 = smul.addr %s186, 64
          %s188 = scalar_lea.hbm %s2, %s187
          %s189 = sshll.u32 %s180, 4
          %s190 = int_to_ptr.vmem [resolvable:$true] %s189
          %195 = dma.hbm_to_vmem [thread:$0]  %s188, 128, %s190, %s177, 64, 64, 4
        $region20: #{tpu_custom_call.1} parent=15 // pred_fallthru
          _
        // Predicated region
        $region21: #{tpu_custom_call.1} parent=15 // pred_check
          %p196 = pneg %p88
        $region22: #{tpu_custom_call.1} parent=15 // pred_check_branch
          %198 = sbr.rel (%p196) target = $region24
        $region23: #{tpu_custom_call.1} parent=15 // pred_region
          %s199 = sand.u32 %s22, 1
          %s200 = scalar_lea.sflag [#allocation13], %s199
          %s201 = sand.u32 %s78, 1
          %s202 = smul.addr %s201, 8
          %s203 = scalar_lea.vmem [#allocation12], %s202
          %s204 = sld [smem:[#allocation8 + %s30]]
          %s206 = ssub.s32 128, 128
          %207 = vsyncadd %s200, %s206
          %s208 = smul.addr %s29, 2
          %s209 = sadd.s32 %s204, %s208
          %s210 = smul.addr %s209, 64
          %s211 = scalar_lea.hbm %s3, %s210
          %s212 = sshll.u32 %s203, 4
          %s213 = int_to_ptr.vmem [resolvable:$true] %s212
          %218 = dma.hbm_to_vmem [thread:$0]  %s211, 128, %s213, %s200, 64, 64, 4
        $region24: #{tpu_custom_call.1} parent=15 // pred_fallthru
          _
        // Predicated region
        $region25: #{tpu_custom_call.1} parent=15 // pred_check
          %p219 = pneg %p118
        $region26: #{tpu_custom_call.1} parent=15 // pred_check_branch
          %221 = sbr.rel (%p219) target = $region28
        $region27: #{tpu_custom_call.1} parent=15 // pred_region
          %s222 = sand.u32 %s22, 1
          %s223 = scalar_lea.sflag [#allocation13], %s222
          %s224 = sand.u32 %s108, 1
          %s225 = smul.addr %s224, 8
          %s226 = scalar_lea.vmem [#allocation14], %s225
          %s227 = sld [smem:[#allocation8 + %s30]]
          %s229 = ssub.s32 128, 128
          %230 = vsyncadd %s223, %s229
          %s231 = smul.addr %s29, 2
          %s232 = sadd.s32 %s227, %s231
          %s233 = smul.addr %s232, 64
          %s234 = scalar_lea.hbm %s4, %s233
          %s235 = sshll.u32 %s226, 4
          %s236 = int_to_ptr.vmem [resolvable:$true] %s235
          %241 = dma.hbm_to_vmem [thread:$0]  %s234, 128, %s236, %s223, 64, 64, 4
        $region28: #{tpu_custom_call.1} parent=15 // pred_fallthru
          _
      $region16: #{tpu_custom_call.1} parent=5 // pred_fallthru
        _
      %p242 = scmp.le.s32.totalorder 1, %s22
      %p243 = scmp.lt.s32.totalorder %s22, 3
      %p244 = pnand %p242, %p243
      %p245 = pneg %p244
      // Predicated region
      $region29: #{tpu_custom_call.1} parent=5 // pred_check
        _
      $region30: #{tpu_custom_call.1} parent=5 // pred_check_branch
        %247 = sbr.rel (%p244) target = $region32
      $region31: #{tpu_custom_call.1} parent=5 // pred_region
        %s248 = ssub.s32 %s22, 1
        %s249 = sand.u32 %s51, 1
        %s250 = scalar_lea.sflag [#allocation10], %s249
        %s251 = sand.u32 %s51, 1
        %s252 = smul.addr %s251, 8
        %s253 = scalar_lea.vmem [#allocation9], %s252
        // Predicated region
        $region33: #{tpu_custom_call.1} parent=31 // pred_check
          %p254 = pneg %p64
        $region34: #{tpu_custom_call.1} parent=31 // pred_check_branch
          %256 = sbr.rel (%p254) target = $region36
        $region35: #{tpu_custom_call.1} parent=31 // pred_region
          %257 = dma.done %s250, 128
        $region36: #{tpu_custom_call.1} parent=31 // pred_fallthru
          _
        %s258 = sand.u32 %s27, 1
        %s259 = scalar_lea.sflag [#allocation13], %s258
        %s260 = sand.u32 %s81, 1
        %s261 = smul.addr %s260, 8
        %s262 = scalar_lea.vmem [#allocation12], %s261
        // Predicated region
        $region37: #{tpu_custom_call.1} parent=31 // pred_check
          %p263 = pneg %p94
        $region38: #{tpu_custom_call.1} parent=31 // pred_check_branch
          %265 = sbr.rel (%p263) target = $region40
        $region39: #{tpu_custom_call.1} parent=31 // pred_region
          %266 = dma.done %s259, 128
        $region40: #{tpu_custom_call.1} parent=31 // pred_fallthru
          _
        %s267 = sand.u32 %s27, 1
        %s268 = scalar_lea.sflag [#allocation13], %s267
        %s269 = sand.u32 %s111, 1
        %s270 = smul.addr %s269, 8
        %s271 = scalar_lea.vmem [#allocation14], %s270
        // Predicated region
        $region41: #{tpu_custom_call.1} parent=31 // pred_check
          %p272 = pneg %p124
        $region42: #{tpu_custom_call.1} parent=31 // pred_check_branch
          %274 = sbr.rel (%p272) target = $region44
        $region43: #{tpu_custom_call.1} parent=31 // pred_region
          %275 = dma.done %s268, 128
        $region44: #{tpu_custom_call.1} parent=31 // pred_fallthru
          _
        %s276 = sand.u32 %s51, 1
        %s277 = scalar_lea.sflag [#allocation10], %s276
        %s278 = sand.u32 %s51, 1
        %s279 = smul.addr %s278, 8
        %s280 = scalar_lea.vmem [#allocation9], %s279
        %p281 = pneg %p64
        %p282 = pneg %p61
        %s283 = sand.u32 %s27, 1
        %s284 = scalar_lea.sflag [#allocation13], %s283
        %s285 = sand.u32 %s81, 1
        %s286 = smul.addr %s285, 8
        %s287 = scalar_lea.vmem [#allocation12], %s286
        %p288 = pneg %p94
        %p289 = pneg %p91
        %s290 = sand.u32 %s27, 1
        %s291 = scalar_lea.sflag [#allocation13], %s290
        %s292 = sand.u32 %s111, 1
        %s293 = smul.addr %s292, 8
        %s294 = scalar_lea.vmem [#allocation14], %s293
        %p295 = pneg %p124
        %p296 = pneg %p121
        %p297 = pneg %p154
        %p298 = pneg %p151
        %s299 = sand.u32 %s141, 1
        %s300 = scalar_lea.sflag [#allocation11], %s299
        %s301 = sand.u32 %s141, 1
        %s302 = smul.addr %s301, 4
        %s303 = scalar_lea.vmem [#allocation15], %s302
        %s304 = sld [smem:[#allocation7 + %s32]]
        %s305 = sld [smem:[#allocation8 + %s32]]
        %s306 = sld [smem:[#allocation8 + %s32]]
        %s307 = sld [smem:[#allocation7 + %s32]]
        %s310 = sld [smem:[#allocation7 + %s32]]
        %s311 = sld [smem:[#allocation8 + %s32]]
        %p312 = scmp.eq.s32.totalorder %s311, 0
        // Predicated region
        $region45: #{tpu_custom_call.1} parent=31 // pred_check
          %p313 = pneg %p312
        $region46: #{tpu_custom_call.1} parent=31 // pred_check_branch
          %315 = sbr.rel (%p313) target = $region48
        $region47: #{tpu_custom_call.1} parent=31 // pred_region
          %vm316 = vcmask 7168
          %317 = vst.msk [vmem:[#allocation2] sm:$0xff] %vm316, -1e+30
          %318 = vst.msk [vmem:[#allocation2 + $0x8] sm:$0xff] %vm316, -1e+30
          %319 = vst.msk [vmem:[#allocation3] sm:$0xff] %vm316, 0.0
          %320 = vst.msk [vmem:[#allocation3 + $0x8] sm:$0xff] %vm316, 0.0
          %vm321 = vcmask 261120
          %322 = vst.msk [vmem:[#allocation4] sm:$0xff] %vm321, 0.0
          %323 = vst.msk [vmem:[#allocation4 + $0x8] sm:$0xff] %vm321, 0.0
          %v324 = vld [vmem:[%s253] sm:$0xf]
          %v325 = vld [vmem:[%s253 + $0x4] sm:$0xf]
          %v326 = vmul.bf16 %v324, 1043676725
          %v327 = vmul.bf16 %v325, 1043676725
          %vm328 = vcmask 257024
          %329 = vst.msk [vmem:[#allocation5] sm:$0xf] %vm328, %v326
          %330 = vst.msk [vmem:[#allocation5 + $0x4] sm:$0xf] %vm328, %v327
        $region48: #{tpu_custom_call.1} parent=31 // pred_fallthru
          _
        %p331 = scmp.lt.s32.totalorder %s311, %s310
        // Predicated region
        $region49: #{tpu_custom_call.1} parent=31 // pred_check
          %p332 = pneg %p331
        $region50: #{tpu_custom_call.1} parent=31 // pred_check_branch
          %334 = sbr.rel (%p332) target = $region52
        $region51: #{tpu_custom_call.1} parent=31 // pred_region
          %v335 = vld [vmem:[%s262] sm:$0xf]
          %v336 = vld [vmem:[%s262 + $0x4] sm:$0xf]
          %v337 = vld [vmem:[%s271] sm:$0xf]
          %v338 = vld [vmem:[%s271 + $0x4] sm:$0xf]
          %v339 = vld [vmem:[#allocation5] sm:$0xf]
          %v340 = vld [vmem:[#allocation5 + $0x4] sm:$0xf]
          %vm341 = vcmask 261120
          %v343 = vsel %vm341, %v339, 0
          %v346 = vsel %vm341, %v335, 0
          %348 = vmatprep.subr.bf16.mxu0 0
          %349 = vmatpush1.bf16.xpose.msra.mxu0 0
          %350 = vmatprep.subr.bf16.mxu0 0
          %351 = vmatpush1.bf16.xpose.msra.mxu0 0
          %352 = vmatprep.subr.bf16.mxu0 0
          %353 = vmatpush1.bf16.xpose.msra.mxu0 0
          %354 = vmatprep.subr.bf16.mxu0 0
          %355 = vmatpush1.bf16.xpose.msra.mxu0 0
          %356 = vmatprep.subr.bf16.mxu0 0
          %357 = vmatpush1.bf16.xpose.msra.mxu0 0
          %358 = vmatprep.subr.bf16.mxu0 0
          %359 = vmatpush1.bf16.xpose.msra.mxu0 0
          %360 = vmatprep.subr.bf16.mxu0 0
          %361 = vmatpush1.bf16.xpose.msra.mxu0 0
          %362 = vmatprep.subr.bf16.mxu0 0
          %363 = vmatpush1.bf16.xpose.msra.mxu0 %v346
          %364 = vmatprep.subr.bf16.mxu0 0
          %365 = vmatpush2.bf16.xpose.msra.mxu0 0
          %366 = vmatprep.subr.bf16.mxu0 0
          %367 = vmatpush2.bf16.xpose.msra.mxu0 0
          %368 = vmatprep.subr.bf16.mxu0 0
          %369 = vmatpush2.bf16.xpose.msra.mxu0 0
          %370 = vmatprep.subr.bf16.mxu0 0
          %371 = vmatpush2.bf16.xpose.msra.mxu0 0
          %372 = vmatprep.subr.bf16.mxu0 0
          %373 = vmatpush2.bf16.xpose.msra.mxu0 0
          %374 = vmatprep.subr.bf16.mxu0 0
          %375 = vmatpush2.bf16.xpose.msra.mxu0 0
          %376 = vmatprep.subr.bf16.mxu0 0
          %377 = vmatpush2.bf16.xpose.msra.mxu0 0
          %378 = vmatprep.subr.bf16.mxu0 0
          %379 = vmatpush2.bf16.xpose.msra.mxu0 0
          %380 = vmatprep.mubr.bf16.mxu0 0
          %381 = vmatmul.mubr.bf16.gmra.mxu0 %v343
          %v382 = vpop.f32.mrf.mxu0
          %v383 = vadd.f32 0.0, %v382
          %v384 = vpop.f32.mrf.mxu0
          %v385 = vpop.f32.mrf.mxu0
          %v386 = vpop.f32.mrf.mxu0
          %387 = vdwg.mxu0
          %v389 = vsel %vm341, %v340, 0
          %v392 = vsel %vm341, %v336, 0
          %394 = vmatprep.subr.bf16.mxu0 0
          %395 = vmatpush1.bf16.xpose.msra.mxu0 0
          %396 = vmatprep.subr.bf16.mxu0 0
          %397 = vmatpush1.bf16.xpose.msra.mxu0 0
          %398 = vmatprep.subr.bf16.mxu0 0
          %399 = vmatpush1.bf16.xpose.msra.mxu0 0
          %400 = vmatprep.subr.bf16.mxu0 0
          %401 = vmatpush1.bf16.xpose.msra.mxu0 0
          %402 = vmatprep.subr.bf16.mxu0 0
          %403 = vmatpush1.bf16.xpose.msra.mxu0 0
          %404 = vmatprep.subr.bf16.mxu0 0
          %405 = vmatpush1.bf16.xpose.msra.mxu0 0
          %406 = vmatprep.subr.bf16.mxu0 0
          %407 = vmatpush1.bf16.xpose.msra.mxu0 0
          %408 = vmatprep.subr.bf16.mxu0 0
          %409 = vmatpush1.bf16.xpose.msra.mxu0 %v392
          %410 = vmatprep.subr.bf16.mxu0 0
          %411 = vmatpush2.bf16.xpose.msra.mxu0 0
          %412 = vmatprep.subr.bf16.mxu0 0
          %413 = vmatpush2.bf16.xpose.msra.mxu0 0
          %414 = vmatprep.subr.bf16.mxu0 0
          %415 = vmatpush2.bf16.xpose.msra.mxu0 0
          %416 = vmatprep.subr.bf16.mxu0 0
          %417 = vmatpush2.bf16.xpose.msra.mxu0 0
          %418 = vmatprep.subr.bf16.mxu0 0
          %419 = vmatpush2.bf16.xpose.msra.mxu0 0
          %420 = vmatprep.subr.bf16.mxu0 0
          %421 = vmatpush2.bf16.xpose.msra.mxu0 0
          %422 = vmatprep.subr.bf16.mxu0 0
          %423 = vmatpush2.bf16.xpose.msra.mxu0 0
          %424 = vmatprep.subr.bf16.mxu0 0
          %425 = vmatpush2.bf16.xpose.msra.mxu0 0
          %426 = vmatprep.mubr.bf16.mxu0 0
          %427 = vmatmul.mubr.bf16.gmra.mxu0 %v389
          %v428 = vpop.f32.mrf.mxu0
          %v429 = vadd.f32 0.0, %v428
          %v430 = vpop.f32.mrf.mxu0
          %v431 = vpop.f32.mrf.mxu0
          %v432 = vpop.f32.mrf.mxu0
          %433 = vdwg.mxu0
          %v434 = vld [vmem:[#allocation2] sm:$0xff]
          %v435 = vld [vmem:[#allocation2 + $0x8] sm:$0xff]
          %vm436 = vcmask 64512
          %v437 = vsel %vm436, %v383, -inf
          %438 = vmax.xlane.f32.xlu0 %v437
          %v439 = vpop.xlane.xlu0 %438
          %v440 = vsel %vm436, %v429, -inf
          %441 = vmax.xlane.f32.xlu0 %v440
          %v442 = vpop.xlane.xlu0 %441
          %v443 = vmax.f32 %v434, %v439
          %v444 = vmax.f32 %v435, %v442
          %v445 = vsub.f32 %v434, %v443
          %v446 = vsub.f32 %v435, %v444
          %v447 = vmul.f32 %v445, 1.442695
          %v448 = vpow.pop %v447
          %v449 = vmul.f32 %v446, 1.442695
          %v450 = vpow.pop %v449
          %452 = vset.pattern.permute.xlu0 0
          %453 = vperm.xlu0 %452, %v443
          %v454 = vpop.permute.xlu0 %453
          %457 = vset.pattern.permute.xlu0 0
          %458 = vperm.xlu0 %457, %v444
          %v459 = vpop.permute.xlu0 %458
          %v461 = vsub.f32 %v383, %v454
          %v462 = vsub.f32 %v429, %v459
          %v463 = vpack.c.bf16 %v461, %v461
          %v464 = vpack.c.bf16 %v462, %v462
          %v466 = vmul.bf16 %v463, 1069105081
          %v467 = vpow.bf16.pop %v466
          %v469 = vmul.bf16 %v464, 1069105081
          %v470 = vpow.bf16.pop %v469
          %v471 = vunpack.c.l.bf16 %v467
          %v472 = vunpack.c.l.bf16 %v470
          %v473 = vsel %vm436, %v471, 0.0
          %474 = vadd.xlane.f32.xlu0 %v473
          %v475 = vpop.xlane.xlu0 %474
          %v476 = vsel %vm436, %v472, 0.0
          %477 = vadd.xlane.f32.xlu0 %v476
          %v478 = vpop.xlane.xlu0 %477
          %v479 = vld [vmem:[#allocation3] sm:$0xff]
          %v480 = vld [vmem:[#allocation3 + $0x8] sm:$0xff]
          %v481 = vmul.f32 %v448, %v479
          %v482 = vmul.f32 %v450, %v480
          %v483 = vadd.f32 %v481, %v475
          %v484 = vadd.f32 %v482, %v478
          %vm485 = vcmask 7168
          %486 = vst.msk [vmem:[#allocation3] sm:$0xff] %vm485, %v483
          %487 = vst.msk [vmem:[#allocation3 + $0x8] sm:$0xff] %vm485, %v484
          %v489 = vsel %vm436, %v467, 0
          %vm491 = vcmask 1043456
          %v493 = vsel %vm491, %v337, 0
          %495 = vmatprep.subr.bf16.mxu0 0
          %496 = vmatpush1.bf16.msra.mxu0 0
          %497 = vmatprep.subr.bf16.mxu0 0
          %498 = vmatpush1.bf16.msra.mxu0 0
          %499 = vmatprep.subr.bf16.mxu0 0
          %500 = vmatpush1.bf16.msra.mxu0 0
          %501 = vmatprep.subr.bf16.mxu0 0
          %502 = vmatpush1.bf16.msra.mxu0 0
          %503 = vmatprep.subr.bf16.mxu0 0
          %504 = vmatpush1.bf16.msra.mxu0 0
          %505 = vmatprep.subr.bf16.mxu0 0
          %506 = vmatpush1.bf16.msra.mxu0 0
          %507 = vmatprep.subr.bf16.mxu0 0
          %508 = vmatpush1.bf16.msra.mxu0 0
          %509 = vmatprep.subr.bf16.mxu0 0
          %510 = vmatpush1.bf16.msra.mxu0 %v493
          %511 = vmatprep.subr.bf16.mxu0 0
          %512 = vmatpush2.bf16.msra.mxu0 0
          %513 = vmatprep.subr.bf16.mxu0 0
          %514 = vmatpush2.bf16.msra.mxu0 0
          %515 = vmatprep.subr.bf16.mxu0 0
          %516 = vmatpush2.bf16.msra.mxu0 0
          %517 = vmatprep.subr.bf16.mxu0 0
          %518 = vmatpush2.bf16.msra.mxu0 0
          %519 = vmatprep.subr.bf16.mxu0 0
          %520 = vmatpush2.bf16.msra.mxu0 0
          %521 = vmatprep.subr.bf16.mxu0 0
          %522 = vmatpush2.bf16.msra.mxu0 0
          %523 = vmatprep.subr.bf16.mxu0 0
          %524 = vmatpush2.bf16.msra.mxu0 0
          %525 = vmatprep.subr.bf16.mxu0 0
          %526 = vmatpush2.bf16.msra.mxu0 0
          %527 = vmatprep.mubr.bf16.mxu0 0
          %528 = vmatmul.mubr.bf16.gmra.mxu0 %v489
          %v529 = vpop.f32.mrf.mxu0
          %v530 = vadd.f32 0.0, %v529
          %v531 = vpop.f32.mrf.mxu0
          %v532 = vpop.f32.mrf.mxu0
          %v533 = vpop.f32.mrf.mxu0
          %534 = vdwg.mxu0
          %v536 = vsel %vm436, %v470, 0
          %v539 = vsel %vm491, %v338, 0
          %541 = vmatprep.subr.bf16.mxu0 0
          %542 = vmatpush1.bf16.msra.mxu0 0
          %543 = vmatprep.subr.bf16.mxu0 0
          %544 = vmatpush1.bf16.msra.mxu0 0
          %545 = vmatprep.subr.bf16.mxu0 0
          %546 = vmatpush1.bf16.msra.mxu0 0
          %547 = vmatprep.subr.bf16.mxu0 0
          %548 = vmatpush1.bf16.msra.mxu0 0
          %549 = vmatprep.subr.bf16.mxu0 0
          %550 = vmatpush1.bf16.msra.mxu0 0
          %551 = vmatprep.subr.bf16.mxu0 0
          %552 = vmatpush1.bf16.msra.mxu0 0
          %553 = vmatprep.subr.bf16.mxu0 0
          %554 = vmatpush1.bf16.msra.mxu0 0
          %555 = vmatprep.subr.bf16.mxu0 0
          %556 = vmatpush1.bf16.msra.mxu0 %v539
          %557 = vmatprep.subr.bf16.mxu0 0
          %558 = vmatpush2.bf16.msra.mxu0 0
          %559 = vmatprep.subr.bf16.mxu0 0
          %560 = vmatpush2.bf16.msra.mxu0 0
          %561 = vmatprep.subr.bf16.mxu0 0
          %562 = vmatpush2.bf16.msra.mxu0 0
          %563 = vmatprep.subr.bf16.mxu0 0
          %564 = vmatpush2.bf16.msra.mxu0 0
          %565 = vmatprep.subr.bf16.mxu0 0
          %566 = vmatpush2.bf16.msra.mxu0 0
          %567 = vmatprep.subr.bf16.mxu0 0
          %568 = vmatpush2.bf16.msra.mxu0 0
          %569 = vmatprep.subr.bf16.mxu0 0
          %570 = vmatpush2.bf16.msra.mxu0 0
          %571 = vmatprep.subr.bf16.mxu0 0
          %572 = vmatpush2.bf16.msra.mxu0 0
          %573 = vmatprep.mubr.bf16.mxu0 0
          %574 = vmatmul.mubr.bf16.gmra.mxu0 %v536
          %v575 = vpop.f32.mrf.mxu0
          %v576 = vadd.f32 0.0, %v575
          %v577 = vpop.f32.mrf.mxu0
          %v578 = vpop.f32.mrf.mxu0
          %v579 = vpop.f32.mrf.mxu0
          %580 = vdwg.mxu0
          %v581 = vld [vmem:[#allocation4] sm:$0xff]
          %v582 = vld [vmem:[#allocation4 + $0x8] sm:$0xff]
          %584 = vset.pattern.permute.xlu0 0
          %585 = vperm.xlu0 %584, %v448
          %v586 = vpop.permute.xlu0 %585
          %589 = vset.pattern.permute.xlu0 0
          %590 = vperm.xlu0 %589, %v450
          %v591 = vpop.permute.xlu0 %590
          %v593 = vmul.f32 %v586, %v581
          %v594 = vmul.f32 %v591, %v582
          %v595 = vadd.f32 %v593, %v530
          %v596 = vadd.f32 %v594, %v576
          %597 = vst.msk [vmem:[#allocation4] sm:$0xff] %vm341, %v595
          %598 = vst.msk [vmem:[#allocation4 + $0x8] sm:$0xff] %vm341, %v596
          %599 = vst.msk [vmem:[#allocation2] sm:$0xff] %vm485, %v443
          %600 = vst.msk [vmem:[#allocation2 + $0x8] sm:$0xff] %vm485, %v444
        $region52: #{tpu_custom_call.1} parent=31 // pred_fallthru
          _
        %p601 = scmp.eq.s32.totalorder %s311, %s310
        // Predicated region
        $region53: #{tpu_custom_call.1} parent=31 // pred_check
          %p602 = pneg %p601
        $region54: #{tpu_custom_call.1} parent=31 // pred_check_branch
          %604 = sbr.rel (%p602) target = $region56
        $region55: #{tpu_custom_call.1} parent=31 // pred_region
          %v605 = vld [vmem:[%s262] sm:$0xf]
          %v606 = vld [vmem:[%s262 + $0x4] sm:$0xf]
          %v607 = vld [vmem:[%s271] sm:$0xf]
          %v608 = vld [vmem:[%s271 + $0x4] sm:$0xf]
          %v609 = vld [vmem:[#allocation5] sm:$0xf]
          %v610 = vld [vmem:[#allocation5 + $0x4] sm:$0xf]
          %vm611 = vcmask 261120
          %v613 = vsel %vm611, %v609, 0
          %v616 = vsel %vm611, %v605, 0
          %618 = vmatprep.subr.bf16.mxu0 0
          %619 = vmatpush1.bf16.xpose.msra.mxu0 0
          %620 = vmatprep.subr.bf16.mxu0 0
          %621 = vmatpush1.bf16.xpose.msra.mxu0 0
          %622 = vmatprep.subr.bf16.mxu0 0
          %623 = vmatpush1.bf16.xpose.msra.mxu0 0
          %624 = vmatprep.subr.bf16.mxu0 0
          %625 = vmatpush1.bf16.xpose.msra.mxu0 0
          %626 = vmatprep.subr.bf16.mxu0 0
          %627 = vmatpush1.bf16.xpose.msra.mxu0 0
          %628 = vmatprep.subr.bf16.mxu0 0
          %629 = vmatpush1.bf16.xpose.msra.mxu0 0
          %630 = vmatprep.subr.bf16.mxu0 0
          %631 = vmatpush1.bf16.xpose.msra.mxu0 0
          %632 = vmatprep.subr.bf16.mxu0 0
          %633 = vmatpush1.bf16.xpose.msra.mxu0 %v616
          %634 = vmatprep.subr.bf16.mxu0 0
          %635 = vmatpush2.bf16.xpose.msra.mxu0 0
          %636 = vmatprep.subr.bf16.mxu0 0
          %637 = vmatpush2.bf16.xpose.msra.mxu0 0
          %638 = vmatprep.subr.bf16.mxu0 0
          %639 = vmatpush2.bf16.xpose.msra.mxu0 0
          %640 = vmatprep.subr.bf16.mxu0 0
          %641 = vmatpush2.bf16.xpose.msra.mxu0 0
          %642 = vmatprep.subr.bf16.mxu0 0
          %643 = vmatpush2.bf16.xpose.msra.mxu0 0
          %644 = vmatprep.subr.bf16.mxu0 0
          %645 = vmatpush2.bf16.xpose.msra.mxu0 0
          %646 = vmatprep.subr.bf16.mxu0 0
          %647 = vmatpush2.bf16.xpose.msra.mxu0 0
          %648 = vmatprep.subr.bf16.mxu0 0
          %649 = vmatpush2.bf16.xpose.msra.mxu0 0
          %650 = vmatprep.mubr.bf16.mxu0 0
          %651 = vmatmul.mubr.bf16.gmra.mxu0 %v613
          %v652 = vpop.f32.mrf.mxu0
          %v653 = vadd.f32 0.0, %v652
          %v654 = vpop.f32.mrf.mxu0
          %v655 = vpop.f32.mrf.mxu0
          %v656 = vpop.f32.mrf.mxu0
          %657 = vdwg.mxu0
          %v659 = vsel %vm611, %v610, 0
          %v662 = vsel %vm611, %v606, 0
          %664 = vmatprep.subr.bf16.mxu0 0
          %665 = vmatpush1.bf16.xpose.msra.mxu0 0
          %666 = vmatprep.subr.bf16.mxu0 0
          %667 = vmatpush1.bf16.xpose.msra.mxu0 0
          %668 = vmatprep.subr.bf16.mxu0 0
          %669 = vmatpush1.bf16.xpose.msra.mxu0 0
          %670 = vmatprep.subr.bf16.mxu0 0
          %671 = vmatpush1.bf16.xpose.msra.mxu0 0
          %672 = vmatprep.subr.bf16.mxu0 0
          %673 = vmatpush1.bf16.xpose.msra.mxu0 0
          %674 = vmatprep.subr.bf16.mxu0 0
          %675 = vmatpush1.bf16.xpose.msra.mxu0 0
          %676 = vmatprep.subr.bf16.mxu0 0
          %677 = vmatpush1.bf16.xpose.msra.mxu0 0
          %678 = vmatprep.subr.bf16.mxu0 0
          %679 = vmatpush1.bf16.xpose.msra.mxu0 %v662
          %680 = vmatprep.subr.bf16.mxu0 0
          %681 = vmatpush2.bf16.xpose.msra.mxu0 0
          %682 = vmatprep.subr.bf16.mxu0 0
          %683 = vmatpush2.bf16.xpose.msra.mxu0 0
          %684 = vmatprep.subr.bf16.mxu0 0
          %685 = vmatpush2.bf16.xpose.msra.mxu0 0
          %686 = vmatprep.subr.bf16.mxu0 0
          %687 = vmatpush2.bf16.xpose.msra.mxu0 0
          %688 = vmatprep.subr.bf16.mxu0 0
          %689 = vmatpush2.bf16.xpose.msra.mxu0 0
          %690 = vmatprep.subr.bf16.mxu0 0
          %691 = vmatpush2.bf16.xpose.msra.mxu0 0
          %692 = vmatprep.subr.bf16.mxu0 0
          %693 = vmatpush2.bf16.xpose.msra.mxu0 0
          %694 = vmatprep.subr.bf16.mxu0 0
          %695 = vmatpush2.bf16.xpose.msra.mxu0 0
          %696 = vmatprep.mubr.bf16.mxu0 0
          %697 = vmatmul.mubr.bf16.gmra.mxu0 %v659
          %v698 = vpop.f32.mrf.mxu0
          %v699 = vadd.f32 0.0, %v698
          %v700 = vpop.f32.mrf.mxu0
          %v701 = vpop.f32.mrf.mxu0
          %v702 = vpop.f32.mrf.mxu0
          %703 = vdwg.mxu0
          %v704 = vlaneseq
          %v705 = vshrl.u32 %v704, 7
          %v706 = vlaneseq
          %v707 = vand.u32 %v706, 127
          %vm708 = vcmp.ge.s32.totalorder %v705, %v707
          %v709 = vsel %vm708, 1, 0
          %vm710 = vcmp.eq.s32.totalorder %v709, 1
          %v711 = vsel %vm710, %v653, -1e+30
          %v712 = vsel %vm710, %v699, -1e+30
          %v713 = vld [vmem:[#allocation2] sm:$0xff]
          %v714 = vld [vmem:[#allocation2 + $0x8] sm:$0xff]
          %vm715 = vcmask 64512
          %v716 = vsel %vm715, %v711, -inf
          %717 = vmax.xlane.f32.xlu0 %v716
          %v718 = vpop.xlane.xlu0 %717
          %v719 = vsel %vm715, %v712, -inf
          %720 = vmax.xlane.f32.xlu0 %v719
          %v721 = vpop.xlane.xlu0 %720
          %v722 = vmax.f32 %v713, %v718
          %v723 = vmax.f32 %v714, %v721
          %v724 = vsub.f32 %v713, %v722
          %v725 = vsub.f32 %v714, %v723
          %v726 = vmul.f32 %v724, 1.442695
          %v727 = vpow.pop %v726
          %v728 = vmul.f32 %v725, 1.442695
          %v729 = vpow.pop %v728
          %731 = vset.pattern.permute.xlu0 0
          %732 = vperm.xlu0 %731, %v722
          %v733 = vpop.permute.xlu0 %732
          %736 = vset.pattern.permute.xlu0 0
          %737 = vperm.xlu0 %736, %v723
          %v738 = vpop.permute.xlu0 %737
          %v740 = vsub.f32 %v711, %v733
          %v741 = vsub.f32 %v712, %v738
          %v742 = vpack.c.bf16 %v740, %v740
          %v743 = vpack.c.bf16 %v741, %v741
          %v745 = vmul.bf16 %v742, 1069105081
          %v746 = vpow.bf16.pop %v745
          %v748 = vmul.bf16 %v743, 1069105081
          %v749 = vpow.bf16.pop %v748
          %v750 = vunpack.c.l.bf16 %v746
          %v751 = vunpack.c.l.bf16 %v749
          %v752 = vsel %vm715, %v750, 0.0
          %753 = vadd.xlane.f32.xlu0 %v752
          %v754 = vpop.xlane.xlu0 %753
          %v755 = vsel %vm715, %v751, 0.0
          %756 = vadd.xlane.f32.xlu0 %v755
          %v757 = vpop.xlane.xlu0 %756
          %v758 = vld [vmem:[#allocation3] sm:$0xff]
          %v759 = vld [vmem:[#allocation3 + $0x8] sm:$0xff]
          %v760 = vmul.f32 %v727, %v758
          %v761 = vmul.f32 %v729, %v759
          %v762 = vadd.f32 %v760, %v754
          %v763 = vadd.f32 %v761, %v757
          %vm764 = vcmask 7168
          %765 = vst.msk [vmem:[#allocation3] sm:$0xff] %vm764, %v762
          %766 = vst.msk [vmem:[#allocation3 + $0x8] sm:$0xff] %vm764, %v763
          %v768 = vsel %vm715, %v746, 0
          %vm770 = vcmask 1043456
          %v772 = vsel %vm770, %v607, 0
          %774 = vmatprep.subr.bf16.mxu0 0
          %775 = vmatpush1.bf16.msra.mxu0 0
          %776 = vmatprep.subr.bf16.mxu0 0
          %777 = vmatpush1.bf16.msra.mxu0 0
          %778 = vmatprep.subr.bf16.mxu0 0
          %779 = vmatpush1.bf16.msra.mxu0 0
          %780 = vmatprep.subr.bf16.mxu0 0
          %781 = vmatpush1.bf16.msra.mxu0 0
          %782 = vmatprep.subr.bf16.mxu0 0
          %783 = vmatpush1.bf16.msra.mxu0 0
          %784 = vmatprep.subr.bf16.mxu0 0
          %785 = vmatpush1.bf16.msra.mxu0 0
          %786 = vmatprep.subr.bf16.mxu0 0
          %787 = vmatpush1.bf16.msra.mxu0 0
          %788 = vmatprep.subr.bf16.mxu0 0
          %789 = vmatpush1.bf16.msra.mxu0 %v772
          %790 = vmatprep.subr.bf16.mxu0 0
          %791 = vmatpush2.bf16.msra.mxu0 0
          %792 = vmatprep.subr.bf16.mxu0 0
          %793 = vmatpush2.bf16.msra.mxu0 0
          %794 = vmatprep.subr.bf16.mxu0 0
          %795 = vmatpush2.bf16.msra.mxu0 0
          %796 = vmatprep.subr.bf16.mxu0 0
          %797 = vmatpush2.bf16.msra.mxu0 0
          %798 = vmatprep.subr.bf16.mxu0 0
          %799 = vmatpush2.bf16.msra.mxu0 0
          %800 = vmatprep.subr.bf16.mxu0 0
          %801 = vmatpush2.bf16.msra.mxu0 0
          %802 = vmatprep.subr.bf16.mxu0 0
          %803 = vmatpush2.bf16.msra.mxu0 0
          %804 = vmatprep.subr.bf16.mxu0 0
          %805 = vmatpush2.bf16.msra.mxu0 0
          %806 = vmatprep.mubr.bf16.mxu0 0
          %807 = vmatmul.mubr.bf16.gmra.mxu0 %v768
          %v808 = vpop.f32.mrf.mxu0
          %v809 = vadd.f32 0.0, %v808
          %v810 = vpop.f32.mrf.mxu0
          %v811 = vpop.f32.mrf.mxu0
          %v812 = vpop.f32.mrf.mxu0
          %813 = vdwg.mxu0
          %v815 = vsel %vm715, %v749, 0
          %v818 = vsel %vm770, %v608, 0
          %820 = vmatprep.subr.bf16.mxu0 0
          %821 = vmatpush1.bf16.msra.mxu0 0
          %822 = vmatprep.subr.bf16.mxu0 0
          %823 = vmatpush1.bf16.msra.mxu0 0
          %824 = vmatprep.subr.bf16.mxu0 0
          %825 = vmatpush1.bf16.msra.mxu0 0
          %826 = vmatprep.subr.bf16.mxu0 0
          %827 = vmatpush1.bf16.msra.mxu0 0
          %828 = vmatprep.subr.bf16.mxu0 0
          %829 = vmatpush1.bf16.msra.mxu0 0
          %830 = vmatprep.subr.bf16.mxu0 0
          %831 = vmatpush1.bf16.msra.mxu0 0
          %832 = vmatprep.subr.bf16.mxu0 0
          %833 = vmatpush1.bf16.msra.mxu0 0
          %834 = vmatprep.subr.bf16.mxu0 0
          %835 = vmatpush1.bf16.msra.mxu0 %v818
          %836 = vmatprep.subr.bf16.mxu0 0
          %837 = vmatpush2.bf16.msra.mxu0 0
          %838 = vmatprep.subr.bf16.mxu0 0
          %839 = vmatpush2.bf16.msra.mxu0 0
          %840 = vmatprep.subr.bf16.mxu0 0
          %841 = vmatpush2.bf16.msra.mxu0 0
          %842 = vmatprep.subr.bf16.mxu0 0
          %843 = vmatpush2.bf16.msra.mxu0 0
          %844 = vmatprep.subr.bf16.mxu0 0
          %845 = vmatpush2.bf16.msra.mxu0 0
          %846 = vmatprep.subr.bf16.mxu0 0
          %847 = vmatpush2.bf16.msra.mxu0 0
          %848 = vmatprep.subr.bf16.mxu0 0
          %849 = vmatpush2.bf16.msra.mxu0 0
          %850 = vmatprep.subr.bf16.mxu0 0
          %851 = vmatpush2.bf16.msra.mxu0 0
          %852 = vmatprep.mubr.bf16.mxu0 0
          %853 = vmatmul.mubr.bf16.gmra.mxu0 %v815
          %v854 = vpop.f32.mrf.mxu0
          %v855 = vadd.f32 0.0, %v854
          %v856 = vpop.f32.mrf.mxu0
          %v857 = vpop.f32.mrf.mxu0
          %v858 = vpop.f32.mrf.mxu0
          %859 = vdwg.mxu0
          %v860 = vld [vmem:[#allocation4] sm:$0xff]
          %v861 = vld [vmem:[#allocation4 + $0x8] sm:$0xff]
          %863 = vset.pattern.permute.xlu0 0
          %864 = vperm.xlu0 %863, %v727
          %v865 = vpop.permute.xlu0 %864
          %868 = vset.pattern.permute.xlu0 0
          %869 = vperm.xlu0 %868, %v729
          %v870 = vpop.permute.xlu0 %869
          %v872 = vmul.f32 %v865, %v860
          %v873 = vmul.f32 %v870, %v861
          %v874 = vadd.f32 %v872, %v809
          %v875 = vadd.f32 %v873, %v855
          %876 = vst.msk [vmem:[#allocation4] sm:$0xff] %vm611, %v874
          %877 = vst.msk [vmem:[#allocation4 + $0x8] sm:$0xff] %vm611, %v875
          %878 = vst.msk [vmem:[#allocation2] sm:$0xff] %vm764, %v722
          %879 = vst.msk [vmem:[#allocation2 + $0x8] sm:$0xff] %vm764, %v723
          %v880 = vld [vmem:[#allocation3] sm:$0xff]
          %v881 = vld [vmem:[#allocation3 + $0x8] sm:$0xff]
          %v882 = vrcp.pop %v880
          %v883 = vrcp.pop %v881
          %v884 = vld [vmem:[#allocation4] sm:$0xff]
          %v885 = vld [vmem:[#allocation4 + $0x8] sm:$0xff]
          %887 = vset.pattern.permute.xlu0 0
          %888 = vperm.xlu0 %887, %v882
          %v889 = vpop.permute.xlu0 %888
          %892 = vset.pattern.permute.xlu0 0
          %893 = vperm.xlu0 %892, %v883
          %v894 = vpop.permute.xlu0 %893
          %v896 = vmul.f32 %v884, %v889
          %v897 = vmul.f32 %v885, %v894
          %899 = vrot.lane.b32.xlu0 %v897, 32
          %v900 = vpop.permute.xlu0 %899
          %v902 = vsel %vm611, %v896, %v900
          %v903 = vpack.c.bf16 %v902, %v902
          %vm904 = vcmask 519168
          %905 = vst.msk [vmem:[%s303] sm:$0xf] %vm904, %v903
        $region56: #{tpu_custom_call.1} parent=31 // pred_fallthru
          _
        %s906 = sand.u32 %s141, 1
        %s907 = scalar_lea.sflag [#allocation11], %s906
        %s908 = sand.u32 %s141, 1
        %s909 = smul.addr %s908, 4
        %s910 = scalar_lea.vmem [#allocation15], %s909
        // Predicated region
        $region57: #{tpu_custom_call.1} parent=31 // pred_check
          %p911 = pneg %p151
        $region58: #{tpu_custom_call.1} parent=31 // pred_check_branch
          %913 = sbr.rel (%p911) target = $region60
        $region59: #{tpu_custom_call.1} parent=31 // pred_region
          %s914 = sld [smem:[#allocation7 + %s32]]
          %s916 = ssub.s32 64, 64
          %917 = vsyncadd %s907, %s916
          %s918 = sadd.s32 %s914, %s31
          %s919 = smul.addr %s918, 64
          %s920 = scalar_lea.hbm %s5, %s919
          %s922 = sshll.u32 %s910, 4
          %s923 = int_to_ptr.vmem [resolvable:$true] %s922
          %925 = dma.vmem_to_hbm [thread:$0]  %s923, 64, %s920, %s907
        $region60: #{tpu_custom_call.1} parent=31 // pred_fallthru
          _
      $region32: #{tpu_custom_call.1} parent=5 // pred_fallthru
        _
      %p926 = scmp.le.s32.totalorder 2, %s22
      // Predicated region
      $region61: #{tpu_custom_call.1} parent=5 // pred_check
        %p927 = pneg %p926
      $region62: #{tpu_custom_call.1} parent=5 // pred_check_branch
        %929 = sbr.rel (%p927) target = $region64
      $region63: #{tpu_custom_call.1} parent=5 // pred_region
        %s930 = ssub.s32 %s22, 2
        // Predicated region
        $region65: #{tpu_custom_call.1} parent=63 // pred_check
          %p931 = pneg %p157
        $region66: #{tpu_custom_call.1} parent=63 // pred_check_branch
          %933 = sbr.rel (%p931) target = $region68
        $region67: #{tpu_custom_call.1} parent=63 // pred_region
          %s934 = sand.u32 %s142, 1
          %s935 = scalar_lea.sflag [#allocation11], %s934
          %s936 = sand.u32 %s142, 1
          %s937 = smul.addr %s936, 4
          %s938 = scalar_lea.vmem [#allocation15], %s937
          %939 = dma.done %s935, 64
        $region68: #{tpu_custom_call.1} parent=63 // pred_fallthru
          _
      $region64: #{tpu_custom_call.1} parent=5 // pred_fallthru
        _
    $region6: #{tpu_custom_call.1} parent=1 // loop_footer
      %s26 = sadd.s32 1, %s22
    $region7: #{tpu_custom_call.1} parent=1 // loop_footer_branch
      %21 = sbr.rel target = $region3
    $region8: #{tpu_custom_call.1} parent=1 // loop_exit
      _
    %940 = vsyncpa [#allocation10], 1
    %s941 = scalar_lea.sflag [#allocation10], 1
    %942 = vsyncpa %s941, 1
    %943 = vsyncpa [#allocation13], 1
    %s944 = scalar_lea.sflag [#allocation13], 1
    %945 = vsyncpa %s944, 1
    %946 = vsyncpa [#allocation11], 1
    %s947 = scalar_lea.sflag [#allocation11], 1
    %948 = vsyncpa %s947, 1

</llo_original>
